<compile_context>
chip_gen: v7x
topology: tpu7x:2x2x1
jax: 0.10.0
libtpu: 0.0.40
codegen_flags: <defaults>
</compile_context>

<pallas_src>
import functools
import math

import jax
import jax.numpy as jnp
from jax.experimental import pallas as pl
from jax.experimental.pallas import tpu as pltpu


# --------------------------------------------------------------------------------------
# Kernel
# --------------------------------------------------------------------------------------
def _fill_circular(scr, val, pad):
    """Write `val` (C, Lv) into scratch `scr` (C, Lv + 2*pad) with circular halo strips."""
    Lv = val.shape[1]
    scr[:, pad:pad + Lv] = val
    if pad > 0:
        scr[:, 0:pad] = val[:, Lv - pad:Lv]                  # left halo  = tail of val
        scr[:, pad + Lv:pad + Lv + pad] = val[:, 0:pad]      # right halo = head of val


def _temporal_block_kernel(*refs, K, dilation, pad, L, L1, L2, has_downsample):
    """One batch element per grid step.

    x_ref   : (1, Cin, L)        input block (original dtype, f32 here)
    w1_ref  : (Cout, K*Cin)      bf16, im2col-folded conv1 weight
    b1_ref  : (Cout, 1)          f32
    w2_ref  : (Cout, K*Cout)     bf16, im2col-folded conv2 weight
    b2_ref  : (Cout, 1)          f32
    [wd_ref : (Cout, Cin) bf16, bd_ref : (Cout, 1) f32]  only if has_downsample
    o_ref   : (1, Cout, L)       f32 output block
    xpad    : VMEM (Cin,  L  + 2*pad) bf16 scratch (circularly padded input)
    h1pad   : VMEM (Cout, L1 + 2*pad) bf16 scratch (circularly padded conv1 output)
    """
    if has_downsample:
        (x_ref, w1_ref, b1_ref, w2_ref, b2_ref, wd_ref, bd_ref,
         o_ref, xpad, h1pad) = refs
    else:
        (x_ref, w1_ref, b1_ref, w2_ref, b2_ref,
         o_ref, xpad, h1pad) = refs

    x = x_ref[0]                                   # (Cin, L), f32 (kept for residual)
    xb = x.astype(jnp.bfloat16)                    # bf16 copy for the MXU paths

    def conv(src_scr, w_ref, b_ref, Lout):
        # im2col: stack the K dilated taps along the channel (sublane) axis, then do a
        # single (Cout, K*C) @ (K*C, Lout) bf16 matmul with f32 accumulation on the MXU.
        cols = [src_scr[:, k * dilation:k * dilation + Lout] for k in range(K)]
        xs = cols[0] if K == 1 else jnp.concatenate(cols, axis=0)       # (K*C, Lout) bf16
        acc = jnp.dot(w_ref[...], xs, preferred_element_type=jnp.float32)
        return acc + b_ref[...]                                         # (Cout, Lout) f32

    # conv1 over the circularly padded input, ReLU.  Dropout = identity (eval).
    _fill_circular(xpad, xb, pad)
    h1 = jnp.maximum(conv(xpad, w1_ref, b1_ref, L1), 0.0)

    # conv2 over circularly padded h1 (wrap period is L1, as in the torch module), ReLU.
    _fill_circular(h1pad, h1.astype(jnp.bfloat16), pad)
    h2 = jnp.maximum(conv(h1pad, w2_ref, b2_ref, L2), 0.0)

    # center crop back to the input length L  (matches int((out_L - in_L)/2)).
    idx = (L2 - L) // 2
    out = h2[:, idx:idx + L]                                            # (Cout, L) f32

    if has_downsample:
        res = jnp.dot(wd_ref[...], xb, preferred_element_type=jnp.float32) + bd_ref[...]
    else:
        res = x.astype(jnp.float32)

    o_ref[0] = jnp.maximum(out + res, 0.0).astype(o_ref.dtype)


# --------------------------------------------------------------------------------------
# Wrapper
# --------------------------------------------------------------------------------------
def temporal_block_forward(x_ncl, params, *, kernel_size, stride, dilation, padding):
    """x_ncl: (B, C_in, L) float32, PyTorch NCL layout.  Returns (B, C_out, L) float32."""
    assert stride == 1  # TODO(synk): stride > 1 not implemented
    B, Cin, L = x_ncl.shape
    K, d, p = kernel_size, dilation, padding
    Cout = params["w1"].shape[0]
    has_ds = "wd" in params

    L1 = L + 2 * p - d * (K - 1)          # conv1 output length
    L2 = L1 + 2 * p - d * (K - 1)         # conv2 output length
    assert L1 > 0 and L2 >= L and p <= L and p <= L1

    # im2col-folded weights, bf16 for the MXU inputs (accumulation stays f32 in-kernel).
    # PyTorch conv weight (Cout, Cin, K) -> (Cout, K*Cin), rows ordered tap-major.
    def fold(w):
        Co, Ci, Kk = w.shape
        return jnp.transpose(w, (0, 2, 1)).reshape(Co, Kk * Ci).astype(jnp.bfloat16)

    w1 = fold(params["w1"])
    w2 = fold(params["w2"])
    b1 = params["b1"].reshape(Cout, 1).astype(jnp.float32)
    b2 = params["b2"].reshape(Cout, 1).astype(jnp.float32)

    def const_spec(arr):
        return pl.BlockSpec(arr.shape, lambda b: (0, 0))   # VMEM-resident across grid steps

    args = [x_ncl, w1, b1, w2, b2]
    in_specs = [
        pl.BlockSpec((1, Cin, L), lambda b: (b, 0, 0)),
        const_spec(w1), const_spec(b1), const_spec(w2), const_spec(b2),
    ]
    if has_ds:
        wd = params["wd"][:, :, 0].astype(jnp.bfloat16)     # (Cout, Cin)
        bd = params["bd"].reshape(Cout, 1).astype(jnp.float32)
        args += [wd, bd]
        in_specs += [const_spec(wd), const_spec(bd)]

    kernel = functools.partial(
        _temporal_block_kernel,
        K=K, dilation=d, pad=p, L=L, L1=L1, L2=L2, has_downsample=has_ds)

    # Per-step VMEM footprint (double-buffered I/O blocks + resident weights + scratches +
    # live f32 intermediates), with headroom; kept within v7x's 64 MiB physical VMEM.
    def nbytes(shape, dt):
        return math.prod(shape) * jnp.dtype(dt).itemsize

    step_bytes = (
        2 * nbytes((1, Cin, L), x_ncl.dtype)
        + 2 * nbytes((1, Cout, L), jnp.float32)
        + nbytes(w1.shape, jnp.bfloat16) + nbytes(w2.shape, jnp.bfloat16)
        + nbytes(b1.shape, jnp.float32) + nbytes(b2.shape, jnp.float32)
        + nbytes((Cin, L + 2 * p), jnp.bfloat16)
        + nbytes((Cout, L1 + 2 * p), jnp.bfloat16)
        + nbytes((Cout, L1), jnp.float32) + nbytes((Cout, L2), jnp.float32))
    vmem_limit = int(min(64 * 1024 * 1024, max(16 * 1024 * 1024, 6 * step_bytes)))

    out = pl.pallas_call(
        kernel,
        out_shape=jax.ShapeDtypeStruct((B, Cout, L), jnp.float32),
        grid_spec=pltpu.PrefetchScalarGridSpec(
            num_scalar_prefetch=0,
            grid=(B,),
            in_specs=in_specs,
            out_specs=pl.BlockSpec((1, Cout, L), lambda b: (b, 0, 0)),
            scratch_shapes=[
                pltpu.VMEM((Cin, L + 2 * p), jnp.bfloat16),     # circularly padded x
                pltpu.VMEM((Cout, L1 + 2 * p), jnp.bfloat16),   # circularly padded h1
            ]),
        compiler_params=pltpu.CompilerParams(
            dimension_semantics=("parallel",),      # megacore: batch axis across TCs (v7x)
            vmem_limit_bytes=vmem_limit),
    )(*args)
    return out                                      # (B, Cout, L) — already PyTorch layout


# --------------------------------------------------------------------------------------
# Parameter construction (deterministic, synthetic) + pure-JAX reference
# --------------------------------------------------------------------------------------
def _weight_norm(v, g):
    # PyTorch weight_norm default dim=0: per-output-channel L2 norm over remaining dims.
    norm = jnp.sqrt(jnp.sum(v * v, axis=(1, 2), keepdims=True))
    return g.reshape(-1, 1, 1) * v / norm


def make_params(key, n_inputs, n_outputs, kernel_size):
    ks = jax.random.split(key, 8)
    v1 = 0.01 * jax.random.normal(ks[0], (n_outputs, n_inputs, kernel_size), jnp.float32)
    g1 = jnp.sqrt(jnp.sum(v1 * v1, axis=(1, 2)))        # weight_norm init: g = ||v||
    v2 = 0.01 * jax.random.normal(ks[1], (n_outputs, n_outputs, kernel_size), jnp.float32)
    g2 = jnp.sqrt(jnp.sum(v2 * v2, axis=(1, 2)))
    params = {
        "w1": _weight_norm(v1, g1),
        "b1": 0.01 * jax.random.normal(ks[2], (n_outputs,), jnp.float32),
        "w2": _weight_norm(v2, g2),
        "b2": 0.01 * jax.random.normal(ks[3], (n_outputs,), jnp.float32),
    }
    if n_inputs != n_outputs:
        params["wd"] = 0.01 * jax.random.normal(ks[4], (n_outputs, n_inputs, 1), jnp.float32)
        params["bd"] = 0.01 * jax.random.normal(ks[5], (n_outputs,), jnp.float32)
    return params


def reference_forward(x, params, *, kernel_size, dilation, padding):
    def conv_circ(h, w, b, pad, dil):
        if pad > 0:
            h = jnp.concatenate([h[:, :, -pad:], h, h[:, :, :pad]], axis=2)
        out = jax.lax.conv_general_dilated(
            h, w, window_strides=(1,), padding="VALID", rhs_dilation=(dil,),
            dimension_numbers=("NCH", "OIH", "NCH"))
        return out + b[None, :, None]

    h1 = jax.nn.relu(conv_circ(x, params["w1"], params["b1"], padding, dilation))
    h2 = jax.nn.relu(conv_circ(h1, params["w2"], params["b2"], padding, dilation))
    idx = (h2.shape[2] - x.shape[2]) // 2
    out = h2[:, :, idx:idx + x.shape[2]]
    res = conv_circ(x, params["wd"], params["bd"], 0, 1) if "wd" in params else x
    return jax.nn.relu(out + res)


# --------------------------------------------------------------------------------------
if __name__ == "__main__":
    key = jax.random.PRNGKey(0)
    K, stride, dil = 3, 1, 2
    pad = (K - 1) * dil  # = 4

    # Case 1: Cin != Cout (exercises the 1x1 downsample residual conv)
    B, n_in, n_out, L = 2, 4, 8, 16
    kx, kp, key = jax.random.split(key, 3)
    x = jax.random.normal(kx, (B, n_in, L), jnp.float32)
    params = make_params(kp, n_in, n_out, K)
    out = jax.block_until_ready(temporal_block_forward(
        x, params, kernel_size=K, stride=stride, dilation=dil, padding=pad))
    ref = reference_forward(x, params, kernel_size=K, dilation=dil, padding=pad)
    assert out.shape == (B, n_out, L), out.shape
    # bf16 MXU inputs with f32 accumulation -> relaxed tolerance vs the f32 reference
    assert jnp.allclose(out, ref, atol=5e-3, rtol=5e-2), float(jnp.max(jnp.abs(out - ref)))

    # Case 2: Cin == Cout (identity residual path)
    kx2, kp2 = jax.random.split(key)
    x2 = jax.random.normal(kx2, (B, n_out, L), jnp.float32)
    params2 = make_params(kp2, n_out, n_out, K)
    out2 = jax.block_until_ready(temporal_block_forward(
        x2, params2, kernel_size=K, stride=stride, dilation=dil, padding=pad))
    ref2 = reference_forward(x2, params2, kernel_size=K, dilation=dil, padding=pad)
    assert out2.shape == (B, n_out, L), out2.shape
    assert jnp.allclose(out2, ref2, atol=5e-3, rtol=5e-2), float(jnp.max(jnp.abs(out2 - ref2)))

    print("KERNEL_OK")
</pallas_src>

<mosaic_0001>
module attributes {stable_mosaic.version = 11 : i64} {
  func.func @_temporal_block_kernel(%arg0: i32, %arg1: memref<1x4x16xf32, #tpu.memory_space<vmem>>, %arg2: memref<8x12xbf16, #tpu.memory_space<vmem>>, %arg3: memref<8x1xf32, #tpu.memory_space<vmem>>, %arg4: memref<8x24xbf16, #tpu.memory_space<vmem>>, %arg5: memref<8x1xf32, #tpu.memory_space<vmem>>, %arg6: memref<8x4xbf16, #tpu.memory_space<vmem>>, %arg7: memref<8x1xf32, #tpu.memory_space<vmem>>, %arg8: memref<1x8x16xf32, #tpu.memory_space<vmem>>, %arg9: memref<4x24xbf16, #tpu.memory_space<vmem>>, %arg10: memref<8x28xbf16, #tpu.memory_space<vmem>>) attributes {dimension_semantics = [#tpu.dimension_semantics<parallel>], iteration_bounds = array<i64: 2>, scalar_prefetch = 0 : i64, scratch_operands = 2 : i64, tpu.core_type = #tpu.core_type<tc>, window_params = [{transform_indices = @transform_0, window_bounds = array<i64: 1, 4, 16>}, {pipeline_mode = #tpu.pipeline_mode<synchronous>, transform_indices = @transform_1, window_bounds = array<i64: 8, 12>}, {pipeline_mode = #tpu.pipeline_mode<synchronous>, transform_indices = @transform_2, window_bounds = array<i64: 8, 1>}, {pipeline_mode = #tpu.pipeline_mode<synchronous>, transform_indices = @transform_3, window_bounds = array<i64: 8, 24>}, {pipeline_mode = #tpu.pipeline_mode<synchronous>, transform_indices = @transform_4, window_bounds = array<i64: 8, 1>}, {pipeline_mode = #tpu.pipeline_mode<synchronous>, transform_indices = @transform_5, window_bounds = array<i64: 8, 4>}, {pipeline_mode = #tpu.pipeline_mode<synchronous>, transform_indices = @transform_6, window_bounds = array<i64: 8, 1>}, {transform_indices = @transform_7, window_bounds = array<i64: 1, 8, 16>}]} {
    %c0 = arith.constant 0 : index
    %c0_0 = arith.constant 0 : index
    %c0_1 = arith.constant 0 : index
    %0 = vector.load %arg1[%c0, %c0_0, %c0_1] : memref<1x4x16xf32, #tpu.memory_space<vmem>>, vector<1x4x16xf32>
    %1 = vector.shape_cast %0 : vector<1x4x16xf32> to vector<4x16xf32>
    %2 = arith.truncf %1 : vector<4x16xf32> to vector<4x16xbf16>
    %c0_2 = arith.constant 0 : index
    %c4 = arith.constant 4 : index
    %3 = vector.load %arg9[%c0_2, %c4] : memref<4x24xbf16, #tpu.memory_space<vmem>>, vector<4x16xbf16>
    tpu.vector_store %arg9[%c0_2, %c4], %2 {strides = array<i32>} : memref<4x24xbf16, #tpu.memory_space<vmem>>, vector<4x16xbf16>,
    %4 = vector.extract_strided_slice %2 {offsets = [0, 12], sizes = [4, 4], strides = [1, 1]} : vector<4x16xbf16> to vector<4x4xbf16>
    %c0_3 = arith.constant 0 : index
    %c0_4 = arith.constant 0 : index
    %5 = vector.load %arg9[%c0_3, %c0_4] : memref<4x24xbf16, #tpu.memory_space<vmem>>, vector<4x4xbf16>
    tpu.vector_store %arg9[%c0_3, %c0_4], %4 {strides = array<i32>} : memref<4x24xbf16, #tpu.memory_space<vmem>>, vector<4x4xbf16>,
    %6 = vector.extract_strided_slice %2 {offsets = [0, 0], sizes = [4, 4], strides = [1, 1]} : vector<4x16xbf16> to vector<4x4xbf16>
    %c0_5 = arith.constant 0 : index
    %c20 = arith.constant 20 : index
    %7 = vector.load %arg9[%c0_5, %c20] : memref<4x24xbf16, #tpu.memory_space<vmem>>, vector<4x4xbf16>
    tpu.vector_store %arg9[%c0_5, %c20], %6 {strides = array<i32>} : memref<4x24xbf16, #tpu.memory_space<vmem>>, vector<4x4xbf16>,
    %c0_6 = arith.constant 0 : index
    %c0_7 = arith.constant 0 : index
    %8 = vector.load %arg9[%c0_6, %c0_7] : memref<4x24xbf16, #tpu.memory_space<vmem>>, vector<4x20xbf16>
    %c0_8 = arith.constant 0 : index
    %c2 = arith.constant 2 : index
    %9 = vector.load %arg9[%c0_8, %c2] : memref<4x24xbf16, #tpu.memory_space<vmem>>, vector<4x20xbf16>
    %c0_9 = arith.constant 0 : index
    %c4_10 = arith.constant 4 : index
    %10 = vector.load %arg9[%c0_9, %c4_10] : memref<4x24xbf16, #tpu.memory_space<vmem>>, vector<4x20xbf16>
    %11 = tpu.concatenate %8, %9, %10 in 0 : vector<4x20xbf16>, vector<4x20xbf16>, vector<4x20xbf16> -> vector<12x20xbf16>
    %c0_11 = arith.constant 0 : index
    %c0_12 = arith.constant 0 : index
    %12 = vector.load %arg2[%c0_11, %c0_12] : memref<8x12xbf16, #tpu.memory_space<vmem>>, vector<8x12xbf16>
    %cst = arith.constant dense<0.000000e+00> : vector<8x20xf32>
    %13 = tpu.matmul %12, %11, %cst {dimension_numbers = #tpu.dot_dimension_numbers<[1], [0], [0], [1], [0, 0, 1, 1], [], []>} : vector<8x12xbf16>, vector<12x20xbf16>, vector<8x20xf32> -> vector<8x20xf32>
    %c0_13 = arith.constant 0 : index
    %c0_14 = arith.constant 0 : index
    %14 = vector.load %arg3[%c0_13, %c0_14] : memref<8x1xf32, #tpu.memory_space<vmem>>, vector<8x1xf32>
    %15 = vector.broadcast %14 : vector<8x1xf32> to vector<8x20xf32>
    %16 = arith.addf %13, %15 : vector<8x20xf32>
    %cst_15 = arith.constant 0.000000e+00 : f32
    %17 = vector.broadcast %cst_15 : f32 to vector<8x20xf32>
    %18 = arith.maximumf %16, %17 : vector<8x20xf32>
    %19 = arith.truncf %18 : vector<8x20xf32> to vector<8x20xbf16>
    %c0_16 = arith.constant 0 : index
    %c4_17 = arith.constant 4 : index
    %20 = vector.load %arg10[%c0_16, %c4_17] : memref<8x28xbf16, #tpu.memory_space<vmem>>, vector<8x20xbf16>
    tpu.vector_store %arg10[%c0_16, %c4_17], %19 {strides = array<i32>} : memref<8x28xbf16, #tpu.memory_space<vmem>>, vector<8x20xbf16>,
    %21 = vector.extract_strided_slice %19 {offsets = [0, 16], sizes = [8, 4], strides = [1, 1]} : vector<8x20xbf16> to vector<8x4xbf16>
    %c0_18 = arith.constant 0 : index
    %c0_19 = arith.constant 0 : index
    %22 = vector.load %arg10[%c0_18, %c0_19] : memref<8x28xbf16, #tpu.memory_space<vmem>>, vector<8x4xbf16>
    tpu.vector_store %arg10[%c0_18, %c0_19], %21 {strides = array<i32>} : memref<8x28xbf16, #tpu.memory_space<vmem>>, vector<8x4xbf16>,
    %23 = vector.extract_strided_slice %19 {offsets = [0, 0], sizes = [8, 4], strides = [1, 1]} : vector<8x20xbf16> to vector<8x4xbf16>
    %c0_20 = arith.constant 0 : index
    %c24 = arith.constant 24 : index
    %24 = vector.load %arg10[%c0_20, %c24] : memref<8x28xbf16, #tpu.memory_space<vmem>>, vector<8x4xbf16>
    tpu.vector_store %arg10[%c0_20, %c24], %23 {strides = array<i32>} : memref<8x28xbf16, #tpu.memory_space<vmem>>, vector<8x4xbf16>,
    %c0_21 = arith.constant 0 : index
    %c0_22 = arith.constant 0 : index
    %25 = vector.load %arg10[%c0_21, %c0_22] : memref<8x28xbf16, #tpu.memory_space<vmem>>, vector<8x24xbf16>
    %c0_23 = arith.constant 0 : index
    %c2_24 = arith.constant 2 : index
    %26 = vector.load %arg10[%c0_23, %c2_24] : memref<8x28xbf16, #tpu.memory_space<vmem>>, vector<8x24xbf16>
    %c0_25 = arith.constant 0 : index
    %c4_26 = arith.constant 4 : index
    %27 = vector.load %arg10[%c0_25, %c4_26] : memref<8x28xbf16, #tpu.memory_space<vmem>>, vector<8x24xbf16>
    %28 = tpu.concatenate %25, %26, %27 in 0 : vector<8x24xbf16>, vector<8x24xbf16>, vector<8x24xbf16> -> vector<24x24xbf16>
    %c0_27 = arith.constant 0 : index
    %c0_28 = arith.constant 0 : index
    %29 = vector.load %arg4[%c0_27, %c0_28] : memref<8x24xbf16, #tpu.memory_space<vmem>>, vector<8x24xbf16>
    %cst_29 = arith.constant dense<0.000000e+00> : vector<8x24xf32>
    %30 = tpu.matmul %29, %28, %cst_29 {dimension_numbers = #tpu.dot_dimension_numbers<[1], [0], [0], [1], [0, 0, 1, 1], [], []>} : vector<8x24xbf16>, vector<24x24xbf16>, vector<8x24xf32> -> vector<8x24xf32>
    %c0_30 = arith.constant 0 : index
    %c0_31 = arith.constant 0 : index
    %31 = vector.load %arg5[%c0_30, %c0_31] : memref<8x1xf32, #tpu.memory_space<vmem>>, vector<8x1xf32>
    %32 = vector.broadcast %31 : vector<8x1xf32> to vector<8x24xf32>
    %33 = arith.addf %30, %32 : vector<8x24xf32>
    %cst_32 = arith.constant 0.000000e+00 : f32
    %34 = vector.broadcast %cst_32 : f32 to vector<8x24xf32>
    %35 = arith.maximumf %33, %34 : vector<8x24xf32>
    %36 = vector.extract_strided_slice %35 {offsets = [0, 4], sizes = [8, 16], strides = [1, 1]} : vector<8x24xf32> to vector<8x16xf32>
    %c0_33 = arith.constant 0 : index
    %c0_34 = arith.constant 0 : index
    %37 = vector.load %arg6[%c0_33, %c0_34] : memref<8x4xbf16, #tpu.memory_space<vmem>>, vector<8x4xbf16>
    %cst_35 = arith.constant dense<0.000000e+00> : vector<8x16xf32>
    %38 = tpu.matmul %37, %2, %cst_35 {dimension_numbers = #tpu.dot_dimension_numbers<[1], [0], [0], [1], [0, 0, 1, 1], [], []>} : vector<8x4xbf16>, vector<4x16xbf16>, vector<8x16xf32> -> vector<8x16xf32>
    %c0_36 = arith.constant 0 : index
    %c0_37 = arith.constant 0 : index
    %39 = vector.load %arg7[%c0_36, %c0_37] : memref<8x1xf32, #tpu.memory_space<vmem>>, vector<8x1xf32>
    %40 = vector.broadcast %39 : vector<8x1xf32> to vector<8x16xf32>
    %41 = arith.addf %38, %40 : vector<8x16xf32>
    %42 = arith.addf %36, %41 : vector<8x16xf32>
    %cst_38 = arith.constant 0.000000e+00 : f32
    %43 = vector.broadcast %cst_38 : f32 to vector<8x16xf32>
    %44 = arith.maximumf %42, %43 : vector<8x16xf32>
    %c0_39 = arith.constant 0 : index
    %c0_40 = arith.constant 0 : index
    %c0_41 = arith.constant 0 : index
    %45 = vector.load %arg8[%c0_39, %c0_40, %c0_41] : memref<1x8x16xf32, #tpu.memory_space<vmem>>, vector<1x8x16xf32>
    %46 = vector.shape_cast %45 : vector<1x8x16xf32> to vector<8x16xf32>
    %47 = vector.shape_cast %44 : vector<8x16xf32> to vector<1x8x16xf32>
    tpu.vector_store %arg8[%c0_39, %c0_40, %c0_41], %47 {strides = array<i32>} : memref<1x8x16xf32, #tpu.memory_space<vmem>>, vector<1x8x16xf32>,
    return
  }
  func.func @transform_0(%arg0: i32) -> (i32, i32, i32) {
    %c0_i32 = arith.constant 0 : i32
    %c0_i32_0 = arith.constant 0 : i32
    %c0_i32_1 = arith.constant 0 : i32
    return %arg0, %c0_i32, %c0_i32_0 : i32, i32, i32
  }
  func.func @transform_1(%arg0: i32) -> (i32, i32) {
    %c0_i32 = arith.constant 0 : i32
    %c0_i32_0 = arith.constant 0 : i32
    %c0_i32_1 = arith.constant 0 : i32
    return %c0_i32, %c0_i32_0 : i32, i32
  }
  func.func @transform_2(%arg0: i32) -> (i32, i32) {
    %c0_i32 = arith.constant 0 : i32
    %c0_i32_0 = arith.constant 0 : i32
    %c0_i32_1 = arith.constant 0 : i32
    return %c0_i32, %c0_i32_0 : i32, i32
  }
  func.func @transform_3(%arg0: i32) -> (i32, i32) {
    %c0_i32 = arith.constant 0 : i32
    %c0_i32_0 = arith.constant 0 : i32
    %c0_i32_1 = arith.constant 0 : i32
    return %c0_i32, %c0_i32_0 : i32, i32
  }
  func.func @transform_4(%arg0: i32) -> (i32, i32) {
    %c0_i32 = arith.constant 0 : i32
    %c0_i32_0 = arith.constant 0 : i32
    %c0_i32_1 = arith.constant 0 : i32
    return %c0_i32, %c0_i32_0 : i32, i32
  }
  func.func @transform_5(%arg0: i32) -> (i32, i32) {
    %c0_i32 = arith.constant 0 : i32
    %c0_i32_0 = arith.constant 0 : i32
    %c0_i32_1 = arith.constant 0 : i32
    return %c0_i32, %c0_i32_0 : i32, i32
  }
  func.func @transform_6(%arg0: i32) -> (i32, i32) {
    %c0_i32 = arith.constant 0 : i32
    %c0_i32_0 = arith.constant 0 : i32
    %c0_i32_1 = arith.constant 0 : i32
    return %c0_i32, %c0_i32_0 : i32, i32
  }
  func.func @transform_7(%arg0: i32) -> (i32, i32, i32) {
    %c0_i32 = arith.constant 0 : i32
    %c0_i32_0 = arith.constant 0 : i32
    %c0_i32_1 = arith.constant 0 : i32
    return %arg0, %c0_i32, %c0_i32_0 : i32, i32, i32
  }
}

</mosaic_0001>

<llo_original>
// kernel: tpu_custom_call.1
$region0: #{tpu_custom_call.1}
  #allocation0 [shape = 'u32[]', space=smem, size = 0x4, offset = 0x4, fixed_abs, tag = 'smem constant byte address 0x4 - core index']
  #allocation1 [shape = 'u32[144,128]{1,0:T(1,128)}', space=vmem, size = 0x12000, scoped, tag = 'internal scratch']
  #allocation2 [shape = 'bf16[4,24]{1,0:T(4,128)(2,1)}', space=vmem, size = 0x400, scoped, tag = 'scratch operand']
  #allocation3 [shape = 'bf16[8,28]{1,0:T(8,128)(2,1)}', space=vmem, size = 0x800, scoped, tag = 'scratch operand']
  %s0 = inlined_call_operand.vmem [shape: f32[2,4,16], index: 0, kind: input, shape index: {}]
  %s1 = inlined_call_operand.vmem [shape: bf16[8,12], index: 1, kind: input, shape index: {}]
  %s2 = inlined_call_operand.vmem [shape: f32[8,1], index: 2, kind: input, shape index: {}]
  %s3 = inlined_call_operand.vmem [shape: bf16[8,24], index: 3, kind: input, shape index: {}]
  %s4 = inlined_call_operand.vmem [shape: f32[8,1], index: 4, kind: input, shape index: {}]
  %s5 = inlined_call_operand.vmem [shape: bf16[8,4], index: 5, kind: input, shape index: {}]
  %s6 = inlined_call_operand.vmem [shape: f32[8,1], index: 6, kind: input, shape index: {}]
  %s7 = inlined_call_operand.hbm [shape: f32[2,8,16], index: 7, kind: output, shape index: {}]
  %s8 = sld [smem:[#allocation0]]
  $region61: #{tpu_custom_call.1} parent=0
    _
  %s10 = ssub.s32 1, %s8
  %s11 = scalar_select 0, %s10, %s8
  $region1: #{tpu_custom_call.1} parent=0
    #allocation4 [shape = 'u8[8192]{0}', space=vmem, size = 0x2000, scoped, tag = 'output window, operand 0']
    #allocation5 [shape = 's32[2]{0}', space=sflag, size = 0x8, scoped, tag = 'scoped memory for tpu_custom_call.1']
    %12 = vsyncpa [#allocation5], 0
    %s13 = scalar_lea.sflag [#allocation5], 1
    %14 = vsyncpa %s13, 0
    loop: start=0, step=1, limit=4
    $region2: #{tpu_custom_call.1} parent=1 // loop_pre_header
      _
    $region3: #{tpu_custom_call.1} parent=1 // loop_header
      %s16 = sphi 0, %s20
      %p17 = scmp.ge.s32.totalorder %s16, 4
      %s26 = sphi 0, %s28
      %s29 = sphi 0, %s26
      %s30 = sphi 0, %s29
      %s46 = sphi 0, %s30
      %s50 = sphi 0, %s50
      %s52 = sphi 0, %s50
      %s53 = sphi 0, %s52
      %s67 = sphi 0, %s53
      %s71 = sphi 0, %s71
      %s73 = sphi 0, %s71
      %s74 = sphi 0, %s73
      %s88 = sphi 0, %s74
      %s92 = sphi 0, %s92
      %s94 = sphi 0, %s92
      %s95 = sphi 0, %s94
      %s109 = sphi 0, %s95
      %s113 = sphi 0, %s113
      %s115 = sphi 0, %s113
      %s116 = sphi 0, %s115
      %s130 = sphi 0, %s116
      %s134 = sphi 0, %s134
      %s136 = sphi 0, %s134
      %s137 = sphi 0, %s136
      %s151 = sphi 0, %s137
      %s155 = sphi 0, %s155
      %s157 = sphi 0, %s155
      %s158 = sphi 0, %s157
      %s172 = sphi 0, %s158
      %s178 = sphi 0, %s180
      %s181 = sphi 0, %s178
      %s182 = sphi 0, %s181
      %s198 = sphi 0, %s182
    $region4: #{tpu_custom_call.1} parent=1 // loop_header_branch
      %19 = sbr.rel (%p17) target = $region8
    $region5: #{tpu_custom_call.1} parent=1 // loop_body
      %s21 = ssub.s32 %s16, 1
      %s22 = ssub.s32 %s16, 2
      %s23 = sadd.s32 %s16, 1
      %s24 = ssub.s32 %s16, %s23
      %p25 = scmp.eq.s32.totalorder %s24, 0
      %s27 = sadd.s32 %s26, 1
      %s28 = scalar_select %p25, %s26, %s27
      %p31 = pneg %p25
      %p32 = scmp.eq.s32.totalorder %s16, 1
      %p33 = por %p31, %p32
      %p34 = scmp.ne.s32.totalorder %s26, %s29
      %p35 = scmp.eq.s32.totalorder %s16, 0
      %p36 = por %p34, %p35
      %p37 = scmp.ne.s32.totalorder %s26, %s29
      %p38 = scmp.eq.s32.totalorder %s21, 1
      %p39 = por %p37, %p38
      %p40 = scmp.ne.s32.totalorder %s29, %s30
      %p41 = scmp.eq.s32.totalorder %s21, 0
      %p42 = por %p40, %p41
      %p43 = scmp.ne.s32.totalorder %s29, %s30
      %p44 = scmp.eq.s32.totalorder %s22, 1
      %p45 = por %p43, %p44
      %p47 = scmp.ne.s32.totalorder %s30, %s46
      %p48 = scmp.eq.s32.totalorder %s22, 0
      %p49 = por %p47, %p48
      %s51 = sadd.s32 %s50, 1
      %p54 = scmp.eq.s32.totalorder %s16, 1
      %p55 = scmp.ne.s32.totalorder %s50, %s52
      %p56 = scmp.eq.s32.totalorder %s16, 0
      %p57 = por %p55, %p56
      %p58 = scmp.ne.s32.totalorder %s50, %s52
      %p59 = scmp.eq.s32.totalorder %s21, 1
      %p60 = por %p58, %p59
      %p61 = scmp.ne.s32.totalorder %s52, %s53
      %p62 = scmp.eq.s32.totalorder %s21, 0
      %p63 = por %p61, %p62
      %p64 = scmp.ne.s32.totalorder %s52, %s53
      %p65 = scmp.eq.s32.totalorder %s22, 1
      %p66 = por %p64, %p65
      %p68 = scmp.ne.s32.totalorder %s53, %s67
      %p69 = scmp.eq.s32.totalorder %s22, 0
      %p70 = por %p68, %p69
      %s72 = sadd.s32 %s71, 1
      %p75 = scmp.eq.s32.totalorder %s16, 1
      %p76 = scmp.ne.s32.totalorder %s71, %s73
      %p77 = scmp.eq.s32.totalorder %s16, 0
      %p78 = por %p76, %p77
      %p79 = scmp.ne.s32.totalorder %s71, %s73
      %p80 = scmp.eq.s32.totalorder %s21, 1
      %p81 = por %p79, %p80
      %p82 = scmp.ne.s32.totalorder %s73, %s74
      %p83 = scmp.eq.s32.totalorder %s21, 0
      %p84 = por %p82, %p83
      %p85 = scmp.ne.s32.totalorder %s73, %s74
      %p86 = scmp.eq.s32.totalorder %s22, 1
      %p87 = por %p85, %p86
      %p89 = scmp.ne.s32.totalorder %s74, %s88
      %p90 = scmp.eq.s32.totalorder %s22, 0
      %p91 = por %p89, %p90
      %s93 = sadd.s32 %s92, 1
      %p96 = scmp.eq.s32.totalorder %s16, 1
      %p97 = scmp.ne.s32.totalorder %s92, %s94
      %p98 = scmp.eq.s32.totalorder %s16, 0
      %p99 = por %p97, %p98
      %p100 = scmp.ne.s32.totalorder %s92, %s94
      %p101 = scmp.eq.s32.totalorder %s21, 1
      %p102 = por %p100, %p101
      %p103 = scmp.ne.s32.totalorder %s94, %s95
      %p104 = scmp.eq.s32.totalorder %s21, 0
      %p105 = por %p103, %p104
      %p106 = scmp.ne.s32.totalorder %s94, %s95
      %p107 = scmp.eq.s32.totalorder %s22, 1
      %p108 = por %p106, %p107
      %p110 = scmp.ne.s32.totalorder %s95, %s109
      %p111 = scmp.eq.s32.totalorder %s22, 0
      %p112 = por %p110, %p111
      %s114 = sadd.s32 %s113, 1
      %p117 = scmp.eq.s32.totalorder %s16, 1
      %p118 = scmp.ne.s32.totalorder %s113, %s115
      %p119 = scmp.eq.s32.totalorder %s16, 0
      %p120 = por %p118, %p119
      %p121 = scmp.ne.s32.totalorder %s113, %s115
      %p122 = scmp.eq.s32.totalorder %s21, 1
      %p123 = por %p121, %p122
      %p124 = scmp.ne.s32.totalorder %s115, %s116
      %p125 = scmp.eq.s32.totalorder %s21, 0
      %p126 = por %p124, %p125
      %p127 = scmp.ne.s32.totalorder %s115, %s116
      %p128 = scmp.eq.s32.totalorder %s22, 1
      %p129 = por %p127, %p128
      %p131 = scmp.ne.s32.totalorder %s116, %s130
      %p132 = scmp.eq.s32.totalorder %s22, 0
      %p133 = por %p131, %p132
      %s135 = sadd.s32 %s134, 1
      %p138 = scmp.eq.s32.totalorder %s16, 1
      %p139 = scmp.ne.s32.totalorder %s134, %s136
      %p140 = scmp.eq.s32.totalorder %s16, 0
      %p141 = por %p139, %p140
      %p142 = scmp.ne.s32.totalorder %s134, %s136
      %p143 = scmp.eq.s32.totalorder %s21, 1
      %p144 = por %p142, %p143
      %p145 = scmp.ne.s32.totalorder %s136, %s137
      %p146 = scmp.eq.s32.totalorder %s21, 0
      %p147 = por %p145, %p146
      %p148 = scmp.ne.s32.totalorder %s136, %s137
      %p149 = scmp.eq.s32.totalorder %s22, 1
      %p150 = por %p148, %p149
      %p152 = scmp.ne.s32.totalorder %s137, %s151
      %p153 = scmp.eq.s32.totalorder %s22, 0
      %p154 = por %p152, %p153
      %s156 = sadd.s32 %s155, 1
      %p159 = scmp.eq.s32.totalorder %s16, 1
      %p160 = scmp.ne.s32.totalorder %s155, %s157
      %p161 = scmp.eq.s32.totalorder %s16, 0
      %p162 = por %p160, %p161
      %p163 = scmp.ne.s32.totalorder %s155, %s157
      %p164 = scmp.eq.s32.totalorder %s21, 1
      %p165 = por %p163, %p164
      %p166 = scmp.ne.s32.totalorder %s157, %s158
      %p167 = scmp.eq.s32.totalorder %s21, 0
      %p168 = por %p166, %p167
      %p169 = scmp.ne.s32.totalorder %s157, %s158
      %p170 = scmp.eq.s32.totalorder %s22, 1
      %p171 = por %p169, %p170
      %p173 = scmp.ne.s32.totalorder %s158, %s172
      %p174 = scmp.eq.s32.totalorder %s22, 0
      %p175 = por %p173, %p174
      %s176 = ssub.s32 %s16, %s23
      %p177 = scmp.eq.s32.totalorder %s176, 0
      %s179 = sadd.s32 %s178, 1
      %s180 = scalar_select %p177, %s178, %s179
      %p183 = pneg %p177
      %p184 = scmp.eq.s32.totalorder %s16, 1
      %p185 = por %p183, %p184
      %p186 = scmp.ne.s32.totalorder %s178, %s181
      %p187 = scmp.eq.s32.totalorder %s16, 0
      %p188 = por %p186, %p187
      %p189 = scmp.ne.s32.totalorder %s178, %s181
      %p190 = scmp.eq.s32.totalorder %s21, 1
      %p191 = por %p189, %p190
      %p192 = scmp.ne.s32.totalorder %s181, %s182
      %p193 = scmp.eq.s32.totalorder %s21, 0
      %p194 = por %p192, %p193
      %p195 = scmp.ne.s32.totalorder %s181, %s182
      %p196 = scmp.eq.s32.totalorder %s22, 1
      %p197 = por %p195, %p196
      %p199 = scmp.ne.s32.totalorder %s182, %s198
      %p200 = scmp.eq.s32.totalorder %s22, 0
      %p201 = por %p199, %p200
      %p202 = scmp.le.s32.totalorder 1, %s16
      %p203 = scmp.lt.s32.totalorder %s16, 3
      %p204 = pnand %p202, %p203
      %p205 = pneg %p204
      // Predicated region
      $region9: #{tpu_custom_call.1} parent=5 // pred_check
        _
      $region10: #{tpu_custom_call.1} parent=5 // pred_check_branch
        %207 = sbr.rel (%p204) target = $region12
      $region11: #{tpu_custom_call.1} parent=5 // pred_region
        %s208 = ssub.s32 %s16, 1
        // Predicated region
        $region13: #{tpu_custom_call.1} parent=11 // pred_check
          %p209 = pneg %p63
        $region14: #{tpu_custom_call.1} parent=11 // pred_check_branch
          %211 = sbr.rel (%p209) target = $region16
        $region15: #{tpu_custom_call.1} parent=11 // pred_region
          _
        $region16: #{tpu_custom_call.1} parent=11 // pred_fallthru
          _
        // Predicated region
        $region17: #{tpu_custom_call.1} parent=11 // pred_check
          %p212 = pneg %p84
        $region18: #{tpu_custom_call.1} parent=11 // pred_check_branch
          %214 = sbr.rel (%p212) target = $region20
        $region19: #{tpu_custom_call.1} parent=11 // pred_region
          _
        $region20: #{tpu_custom_call.1} parent=11 // pred_fallthru
          _
        // Predicated region
        $region21: #{tpu_custom_call.1} parent=11 // pred_check
          %p215 = pneg %p105
        $region22: #{tpu_custom_call.1} parent=11 // pred_check_branch
          %217 = sbr.rel (%p215) target = $region24
        $region23: #{tpu_custom_call.1} parent=11 // pred_region
          _
        $region24: #{tpu_custom_call.1} parent=11 // pred_fallthru
          _
        // Predicated region
        $region25: #{tpu_custom_call.1} parent=11 // pred_check
          %p218 = pneg %p126
        $region26: #{tpu_custom_call.1} parent=11 // pred_check_branch
          %220 = sbr.rel (%p218) target = $region28
        $region27: #{tpu_custom_call.1} parent=11 // pred_region
          _
        $region28: #{tpu_custom_call.1} parent=11 // pred_fallthru
          _
        // Predicated region
        $region29: #{tpu_custom_call.1} parent=11 // pred_check
          %p221 = pneg %p147
        $region30: #{tpu_custom_call.1} parent=11 // pred_check_branch
          %223 = sbr.rel (%p221) target = $region32
        $region31: #{tpu_custom_call.1} parent=11 // pred_region
          _
        $region32: #{tpu_custom_call.1} parent=11 // pred_fallthru
          _
        // Predicated region
        $region33: #{tpu_custom_call.1} parent=11 // pred_check
          %p224 = pneg %p168
        $region34: #{tpu_custom_call.1} parent=11 // pred_check_branch
          %226 = sbr.rel (%p224) target = $region36
        $region35: #{tpu_custom_call.1} parent=11 // pred_region
          _
        $region36: #{tpu_custom_call.1} parent=11 // pred_fallthru
          _
      $region12: #{tpu_custom_call.1} parent=5 // pred_fallthru
        _
      %p227 = scmp.lt.s32.totalorder %s16, 2
      // Predicated region
      $region37: #{tpu_custom_call.1} parent=5 // pred_check
        %p228 = pneg %p227
      $region38: #{tpu_custom_call.1} parent=5 // pred_check_branch
        %230 = sbr.rel (%p228) target = $region40
      $region39: #{tpu_custom_call.1} parent=5 // pred_region
        // Predicated region
        $region41: #{tpu_custom_call.1} parent=39 // pred_check
          %p231 = pneg %p36
        $region42: #{tpu_custom_call.1} parent=39 // pred_check_branch
          %233 = sbr.rel (%p231) target = $region44
        $region43: #{tpu_custom_call.1} parent=39 // pred_region
          %p234 = scmp.lt.s32.totalorder %s16, 1
          %s235 = scalar_select %p234, %s16, 1
          %s236 = smul.addr %s235, 4
          %s237 = scalar_lea.vmem %s0, %s236
        $region44: #{tpu_custom_call.1} parent=39 // pred_fallthru
          _
      $region40: #{tpu_custom_call.1} parent=5 // pred_fallthru
        _
      %p238 = scmp.le.s32.totalorder 1, %s16
      %p239 = scmp.lt.s32.totalorder %s16, 3
      %p240 = pnand %p238, %p239
      %p241 = pneg %p240
      // Predicated region
      $region45: #{tpu_custom_call.1} parent=5 // pred_check
        _
      $region46: #{tpu_custom_call.1} parent=5 // pred_check_branch
        %243 = sbr.rel (%p240) target = $region48
      $region47: #{tpu_custom_call.1} parent=5 // pred_region
        %s244 = ssub.s32 %s16, 1
        %p245 = scmp.lt.s32.totalorder %s21, 1
        %s246 = scalar_select %p245, %s21, 1
        %s247 = smul.addr %s246, 4
        %s248 = scalar_lea.vmem %s0, %s247
        %p249 = pneg %p42
        %p250 = pneg %p39
        %p251 = pneg %p63
        %p252 = pneg %p60
        %p253 = pneg %p84
        %p254 = pneg %p81
        %p255 = pneg %p105
        %p256 = pneg %p102
        %p257 = pneg %p126
        %p258 = pneg %p123
        %p259 = pneg %p147
        %p260 = pneg %p144
        %p261 = pneg %p168
        %p262 = pneg %p165
        %p263 = pneg %p194
        %p264 = pneg %p191
        %s265 = sand.u32 %s181, 1
        %s266 = scalar_lea.sflag [#allocation5], %s265
        %s267 = sand.u32 %s181, 1
        %s268 = smul.addr %s267, 8
        %s269 = scalar_lea.vmem [#allocation4], %s268
        %p270 = scmp.lt.s32.totalorder %s21, 1
        %s271 = scalar_select %p270, %s21, 1
        %s272 = smul.addr %s271, 4
        %s273 = scalar_lea.vmem %s0, %s272
        %v275 = vld [vmem:[%s273] sm:$0xf]
        %v276 = vpack.c.bf16 %v275, %v275
        %v279 = vunpack.c.l.s4 1983009808
        %v280 = vunpack.c.0.s8 %v279
        %v281 = vlaneseq
        %v282 = vshrl.u32 %v281, 7
        %v283 = vsub.s32 %v280, %v282
        %v284 = vrot.slane %v276, %v283
        %285 = vrot.lane.b32.xlu0 %v284, 4
        %v286 = vpop.permute.xlu0 %285
        %vm288 = vcmask 156704
        %289 = vst.msk [vmem:[#allocation2] sm:$0x3] %vm288, %v286
        %290 = vrot.lane.b32.xlu0 %v284, 116
        %v291 = vpop.permute.xlu0 %290
        %vm293 = vcmask 25600
        %294 = vst.msk [vmem:[#allocation2] sm:$0x3] %vm293, %v291
        %295 = vrot.lane.b32.xlu0 %v284, 20
        %v296 = vpop.permute.xlu0 %295
        %vm298 = vcmask 189600
        %299 = vst.msk [vmem:[#allocation2] sm:$0x3] %vm298, %v296
        %v300 = vld [vmem:[#allocation2] sm:$0x3]
        %v302 = vcombine.low %v300, %v300
        %v304 = vunpack.c.l.s4 1983009808
        %v305 = vunpack.c.0.s8 %v304
        %v306 = vlaneseq
        %v307 = vshrl.u32 %v306, 7
        %v308 = vsub.s32 %v305, %v307
        %v309 = vrot.slane %v302, %v308
        %v311 = vunpack.c.l.s4 1983009808
        %v312 = vunpack.c.0.s8 %v311
        %v313 = vlaneseq
        %v314 = vshrl.u32 %v313, 7
        %v315 = vsub.s32 %v312, %v314
        %v316 = vrot.slane %v300, %v315
        %317 = vrot.lane.b32.xlu0 %v309, 126
        %v318 = vpop.permute.xlu0 %317
        %v319 = vcombine.low %v316, %v316
        %320 = vrot.lane.b32.xlu0 %v319, 124
        %v321 = vpop.permute.xlu0 %320
        %vm322 = vcmask 1041408
        %v325 = vsel %vm322, %v300, %v318
        %vm326 = vcmask 1043456
        %v328 = vsel %vm326, %v325, %v321
        %v329 = vld [vmem:[%s1] sm:$0xf]
        %v330 = vld [vmem:[%s2] sm:$0xff]
        %332 = vset.pattern.permute.xlu0 0
        %333 = vperm.xlu0 %332, %v330
        %v334 = vpop.permute.xlu0 %333
        %vm336 = vcmask 97280
        %v338 = vsel %vm336, %v329, 0
        %vm340 = vcmask 1045504
        %v341 = vsel %vm340, %v328, 0
        %343 = vmatprep.subr.bf16.mxu0 0
        %344 = vmatpush1.bf16.msra.mxu0 %v341
        %345 = vmatprep.subr.bf16.mxu0 0
        %346 = vmatpush1.bf16.msra.mxu0 0
        %347 = vmatprep.subr.bf16.mxu0 0
        %348 = vmatpush1.bf16.msra.mxu0 0
        %349 = vmatprep.subr.bf16.mxu0 0
        %350 = vmatpush1.bf16.msra.mxu0 0
        %351 = vmatprep.subr.bf16.mxu0 0
        %352 = vmatpush1.bf16.msra.mxu0 0
        %353 = vmatprep.subr.bf16.mxu0 0
        %354 = vmatpush1.bf16.msra.mxu0 0
        %355 = vmatprep.subr.bf16.mxu0 0
        %356 = vmatpush1.bf16.msra.mxu0 0
        %357 = vmatprep.subr.bf16.mxu0 0
        %358 = vmatpush1.bf16.msra.mxu0 0
        %359 = vmatprep.subr.bf16.mxu0 0
        %360 = vmatpush1.bf16.msra.mxu0 0
        %361 = vmatprep.subr.bf16.mxu0 0
        %362 = vmatpush1.bf16.msra.mxu0 0
        %363 = vmatprep.subr.bf16.mxu0 0
        %364 = vmatpush1.bf16.msra.mxu0 0
        %365 = vmatprep.subr.bf16.mxu0 0
        %366 = vmatpush1.bf16.msra.mxu0 0
        %367 = vmatprep.subr.bf16.mxu0 0
        %368 = vmatpush1.bf16.msra.mxu0 0
        %369 = vmatprep.subr.bf16.mxu0 0
        %370 = vmatpush1.bf16.msra.mxu0 0
        %371 = vmatprep.subr.bf16.mxu0 0
        %372 = vmatpush1.bf16.msra.mxu0 0
        %373 = vmatprep.subr.bf16.mxu0 0
        %374 = vmatpush1.bf16.msra.mxu0 0
        %375 = vmatprep.mubr.bf16.mxu0 0
        %376 = vmatmul.mubr.bf16.gmra.mrb[0].mxu0 %v338
        %v377 = vpop.f32.mrb[0].mxu0
        %v378 = vadd.f32 %v334, %v377
        %v379 = vpop.f32.mrb[0].mxu0
        %v380 = vpop.f32.mrb[0].mxu0
        %v381 = vpop.f32.mrb[0].mxu0
        %382 = vdwg.mxu0
        %v383 = vmax.f32 %v378, 0.0
        %v384 = vpack.c.bf16 %v383, %v383
        %v386 = vunpack.c.l.b16 %v384
        %v387 = vpack.c.b16 %v386, %v386
        %388 = vrot.lane.b32.xlu0 %v387, 4
        %v389 = vpop.permute.xlu0 %388
        %vm391 = vcmask 191520
        %392 = vst.msk [vmem:[#allocation3] sm:$0xf] %vm391, %v389
        %393 = vrot.lane.b32.xlu0 %v387, 112
        %v394 = vpop.permute.xlu0 %393
        %vm396 = vcmask 27648
        %397 = vst.msk [vmem:[#allocation3] sm:$0xf] %vm396, %v394
        %398 = vrot.lane.b32.xlu0 %v387, 24
        %v399 = vpop.permute.xlu0 %398
        %vm401 = vcmask 224448
        %402 = vst.msk [vmem:[#allocation3] sm:$0xf] %vm401, %v399
        %v403 = vld [vmem:[#allocation3] sm:$0xf]
        %v405 = vunpack.c.l.b16 %v403
        %v406 = vpack.c.b16 %v405, %v405
        %407 = vrot.lane.b32.xlu0 %v406, 126
        %v408 = vpop.permute.xlu0 %407
        %409 = vrot.lane.b32.xlu0 %v406, 124
        %v410 = vpop.permute.xlu0 %409
        %v413 = vsel %vm326, %v403, %v408
        %v415 = vld [vmem:[%s3] sm:$0xf]
        %v416 = vld [vmem:[%s4] sm:$0xff]
        %418 = vset.pattern.permute.xlu0 0
        %419 = vperm.xlu0 %418, %v416
        %v420 = vpop.permute.xlu0 %419
        %vm422 = vcmask 195584
        %v424 = vsel %vm422, %v415, 0
        %v427 = vsel %vm326, %v410, 0
        %429 = vmatprep.subr.bf16.mxu0 0
        %430 = vmatpush1.bf16.msra.mxu0 %v413
        %431 = vmatprep.subr.bf16.mxu0 0
        %432 = vmatpush1.bf16.msra.mxu0 %v427
        %433 = vmatprep.subr.bf16.mxu0 0
        %434 = vmatpush1.bf16.msra.mxu0 0
        %435 = vmatprep.subr.bf16.mxu0 0
        %436 = vmatpush1.bf16.msra.mxu0 0
        %437 = vmatprep.subr.bf16.mxu0 0
        %438 = vmatpush1.bf16.msra.mxu0 0
        %439 = vmatprep.subr.bf16.mxu0 0
        %440 = vmatpush1.bf16.msra.mxu0 0
        %441 = vmatprep.subr.bf16.mxu0 0
        %442 = vmatpush1.bf16.msra.mxu0 0
        %443 = vmatprep.subr.bf16.mxu0 0
        %444 = vmatpush1.bf16.msra.mxu0 0
        %445 = vmatprep.subr.bf16.mxu0 0
        %446 = vmatpush1.bf16.msra.mxu0 0
        %447 = vmatprep.subr.bf16.mxu0 0
        %448 = vmatpush1.bf16.msra.mxu0 0
        %449 = vmatprep.subr.bf16.mxu0 0
        %450 = vmatpush1.bf16.msra.mxu0 0
        %451 = vmatprep.subr.bf16.mxu0 0
        %452 = vmatpush1.bf16.msra.mxu0 0
        %453 = vmatprep.subr.bf16.mxu0 0
        %454 = vmatpush1.bf16.msra.mxu0 0
        %455 = vmatprep.subr.bf16.mxu0 0
        %456 = vmatpush1.bf16.msra.mxu0 0
        %457 = vmatprep.subr.bf16.mxu0 0
        %458 = vmatpush1.bf16.msra.mxu0 0
        %459 = vmatprep.subr.bf16.mxu0 0
        %460 = vmatpush1.bf16.msra.mxu0 0
        %461 = vmatprep.mubr.bf16.mxu0 0
        %462 = vmatmul.mubr.bf16.gmra.mrb[0].mxu0 %v424
        %v463 = vpop.f32.mrb[0].mxu0
        %v464 = vadd.f32 %v420, %v463
        %v465 = vpop.f32.mrb[0].mxu0
        %v466 = vpop.f32.mrb[0].mxu0
        %v467 = vpop.f32.mrb[0].mxu0
        %468 = vdwg.mxu0
        %v469 = vmax.f32 %v464, 0.0
        %v470 = vld [vmem:[%s5] sm:$0xf]
        %v471 = vld [vmem:[%s6] sm:$0xff]
        %473 = vset.pattern.permute.xlu0 0
        %474 = vperm.xlu0 %473, %v471
        %v475 = vpop.permute.xlu0 %474
        %vm477 = vcmask 31744
        %v479 = vsel %vm477, %v470, 0
        %v482 = vsel %vm322, %v276, 0
        %484 = vmatprep.subr.bf16.mxu0 0
        %485 = vmatpush1.bf16.msra.mxu0 %v482
        %486 = vmatprep.subr.bf16.mxu0 0
        %487 = vmatpush1.bf16.msra.mxu0 0
        %488 = vmatprep.subr.bf16.mxu0 0
        %489 = vmatpush1.bf16.msra.mxu0 0
        %490 = vmatprep.subr.bf16.mxu0 0
        %491 = vmatpush1.bf16.msra.mxu0 0
        %492 = vmatprep.subr.bf16.mxu0 0
        %493 = vmatpush1.bf16.msra.mxu0 0
        %494 = vmatprep.subr.bf16.mxu0 0
        %495 = vmatpush1.bf16.msra.mxu0 0
        %496 = vmatprep.subr.bf16.mxu0 0
        %497 = vmatpush1.bf16.msra.mxu0 0
        %498 = vmatprep.subr.bf16.mxu0 0
        %499 = vmatpush1.bf16.msra.mxu0 0
        %500 = vmatprep.subr.bf16.mxu0 0
        %501 = vmatpush1.bf16.msra.mxu0 0
        %502 = vmatprep.subr.bf16.mxu0 0
        %503 = vmatpush1.bf16.msra.mxu0 0
        %504 = vmatprep.subr.bf16.mxu0 0
        %505 = vmatpush1.bf16.msra.mxu0 0
        %506 = vmatprep.subr.bf16.mxu0 0
        %507 = vmatpush1.bf16.msra.mxu0 0
        %508 = vmatprep.subr.bf16.mxu0 0
        %509 = vmatpush1.bf16.msra.mxu0 0
        %510 = vmatprep.subr.bf16.mxu0 0
        %511 = vmatpush1.bf16.msra.mxu0 0
        %512 = vmatprep.subr.bf16.mxu0 0
        %513 = vmatpush1.bf16.msra.mxu0 0
        %514 = vmatprep.subr.bf16.mxu0 0
        %515 = vmatpush1.bf16.msra.mxu0 0
        %516 = vmatprep.mubr.bf16.mxu0 0
        %517 = vmatmul.mubr.bf16.gmra.mrb[0].mxu0 %v479
        %v518 = vpop.f32.mrb[0].mxu0
        %v519 = vadd.f32 %v475, %v518
        %v520 = vpop.f32.mrb[0].mxu0
        %v521 = vpop.f32.mrb[0].mxu0
        %v522 = vpop.f32.mrb[0].mxu0
        %523 = vdwg.mxu0
        %525 = vrot.lane.b32.xlu0 %v519, 4
        %v526 = vpop.permute.xlu0 %525
        %v528 = vadd.f32 %v469, %v526
        %v529 = vmax.f32 %v528, 0.0
        %531 = vrot.lane.b32.xlu0 %v529, 124
        %v532 = vpop.permute.xlu0 %531
        %vm534 = vcmask 130048
        %535 = vst.msk [vmem:[%s269] sm:$0xff] %vm534, %v532
        %s536 = sand.u32 %s181, 1
        %s537 = scalar_lea.sflag [#allocation5], %s536
        %s538 = sand.u32 %s181, 1
        %s539 = smul.addr %s538, 8
        %s540 = scalar_lea.vmem [#allocation4], %s539
        // Predicated region
        $region49: #{tpu_custom_call.1} parent=47 // pred_check
          %p541 = pneg %p191
        $region50: #{tpu_custom_call.1} parent=47 // pred_check_branch
          %543 = sbr.rel (%p541) target = $region52
        $region51: #{tpu_custom_call.1} parent=47 // pred_region
          %s545 = ssub.s32 128, 128
          %546 = vsyncadd %s537, %s545
          %s547 = smul.addr %s21, 128
          %s548 = scalar_lea.hbm %s7, %s547
          %s550 = sshll.u32 %s540, 4
          %s551 = int_to_ptr.vmem [resolvable:$true] %s550
          %553 = dma.vmem_to_hbm [thread:$0]  %s551, 128, %s548, %s537
        $region52: #{tpu_custom_call.1} parent=47 // pred_fallthru
          _
      $region48: #{tpu_custom_call.1} parent=5 // pred_fallthru
        _
      %p554 = scmp.le.s32.totalorder 2, %s16
      // Predicated region
      $region53: #{tpu_custom_call.1} parent=5 // pred_check
        %p555 = pneg %p554
      $region54: #{tpu_custom_call.1} parent=5 // pred_check_branch
        %557 = sbr.rel (%p555) target = $region56
      $region55: #{tpu_custom_call.1} parent=5 // pred_region
        %s558 = ssub.s32 %s16, 2
        // Predicated region
        $region57: #{tpu_custom_call.1} parent=55 // pred_check
          %p559 = pneg %p197
        $region58: #{tpu_custom_call.1} parent=55 // pred_check_branch
          %561 = sbr.rel (%p559) target = $region60
        $region59: #{tpu_custom_call.1} parent=55 // pred_region
          %s562 = sand.u32 %s182, 1
          %s563 = scalar_lea.sflag [#allocation5], %s562
          %s564 = sand.u32 %s182, 1
          %s565 = smul.addr %s564, 8
          %s566 = scalar_lea.vmem [#allocation4], %s565
          %567 = dma.done %s563, 128
        $region60: #{tpu_custom_call.1} parent=55 // pred_fallthru
          _
      $region56: #{tpu_custom_call.1} parent=5 // pred_fallthru
        _
    $region6: #{tpu_custom_call.1} parent=1 // loop_footer
      %s20 = sadd.s32 1, %s16
    $region7: #{tpu_custom_call.1} parent=1 // loop_footer_branch
      %15 = sbr.rel target = $region3
    $region8: #{tpu_custom_call.1} parent=1 // loop_exit
      _
    %568 = vsyncpa [#allocation5], 1
    %s569 = scalar_lea.sflag [#allocation5], 1
    %570 = vsyncpa %s569, 1

</llo_original>
